<compile_context>
chip_gen: v6e
topology: v6e:2x2x1
jax: 0.10.0
libtpu: 0.0.40
codegen_flags: <defaults>
</compile_context>

<pallas_src>
import functools

import jax
import jax.numpy as jnp
from jax.experimental import pallas as pl
from jax.experimental.pallas import tpu as pltpu


def _round_up(n, m):
    return (n + m - 1) // m * m


# ----------------------------------------------------------------------------
# Single-step cell kernel: one fused [Bp,Kp]x[Kp,5Hp] matmul + Wco matmul.
# ----------------------------------------------------------------------------
def _cell_kernel(z_ref, dt_ref, c_prev_ref,
                 w_big_ref, b_big_ref, wtt_ref, btt_ref, wco_ref, bco_ref,
                 hc_out_ref, *, hp):
    mm_dtype = w_big_ref.dtype            # bf16 by default (set by the wrapper)
    z = z_ref[...]                        # [Bp, Kp] = [x | h_prev | dt | 0], mm dtype
    dt = dt_ref[...]                      # [Bp, 1]  f32
    c_prev = c_prev_ref[...]              # [Bp, Hp] f32

    # One fused MXU matmul for all gate pre-activations: [Bp, 5*Hp] (f32 acc).
    g = jnp.dot(z, w_big_ref[...], preferred_element_type=jnp.float32) + b_big_ref[...]

    xi = g[:, 0 * hp:1 * hp]
    xf = g[:, 1 * hp:2 * hp]
    xt = g[:, 2 * hp:3 * hp]
    xc = g[:, 3 * hp:4 * hp]
    xo = g[:, 4 * hp:5 * hp]

    # dt @ Wtt + btt == broadcast multiply (Wtt has a single input row).
    tt = dt * wtt_ref[...] + btt_ref[...]                     # [Bp, Hp]

    i_t = jax.nn.sigmoid(xi)
    f_t = jax.nn.sigmoid(xf)
    T_t = jax.nn.sigmoid(xt + jax.nn.sigmoid(tt))
    c_hat = jnp.tanh(xc)

    c_t = f_t * c_prev + i_t * T_t * c_hat                    # [Bp, Hp] f32

    gco = jnp.dot(c_t.astype(mm_dtype), wco_ref[...],
                  preferred_element_type=jnp.float32) + bco_ref[...]
    o_t = jax.nn.sigmoid(xo + gco)
    h_t = o_t * jnp.tanh(c_t)

    # Lane-dense packed output: h in [:, :Hp], c in [:, Hp:2Hp].
    hc_out_ref[:, 0 * hp:1 * hp] = h_t
    hc_out_ref[:, 1 * hp:2 * hp] = c_t


# ----------------------------------------------------------------------------
# Sequence kernel: grid=(T/TT,), TT steps per grid invocation.
#   * bulk x/dt projection + full T-gate once per chunk (M = TT*Bp)
#   * per-step recurrence: h_prev @ Wh[Hp,4Hp] + c_t @ Wco[Hp,Hp]
#   * weights resident in VMEM, h/c carried in VMEM scratch across grid steps
# ----------------------------------------------------------------------------
def _seq_kernel(xz_ref, dt_ref, h0_ref, c0_ref,
                wx_ref, wh_ref, b_ref, wtt_ref, btt_ref, wco_ref,
                hc_ref, gx_sc, h_sc, c_sc, *, hp, bp, tt_steps):
    @pl.when(pl.program_id(0) == 0)
    def _():
        h_sc[...] = h0_ref[...]
        c_sc[...] = c0_ref[...]

    mm_dtype = wx_ref.dtype

    # ---- bulk, x/dt-only work for the whole TT-step chunk ------------------
    # g = [xi|xf|xc|xo|xt] pre-activations incl. biases (o bias incl. bto+bco).
    g = (jnp.dot(xz_ref[...], wx_ref[...], preferred_element_type=jnp.float32)
         + b_ref[...])                                        # [TT*Bp, 5*Hp]
    ttv = dt_ref[...] * wtt_ref[...] + btt_ref[...]           # [TT*Bp, Hp]
    t_gate = jax.nn.sigmoid(g[:, 4 * hp:5 * hp] + jax.nn.sigmoid(ttv))
    gx_sc[:, 0:4 * hp] = g[:, 0:4 * hp]
    gx_sc[:, 4 * hp:5 * hp] = t_gate                          # fully-computed T gate

    # ---- serial recurrence over the TT steps of this chunk -----------------
    def step(t, carry):
        idx = pl.multiple_of(t * bp, bp)
        gx = gx_sc[pl.ds(idx, bp), :]                         # [Bp, 5*Hp]
        h_prev = h_sc[...]                                    # f32 carries
        c_prev = c_sc[...]

        gh = jnp.dot(h_prev.astype(mm_dtype), wh_ref[...],
                     preferred_element_type=jnp.float32)      # [Bp, 4*Hp]
        pre = gx[:, 0:4 * hp] + gh

        i_t = jax.nn.sigmoid(pre[:, 0 * hp:1 * hp])
        f_t = jax.nn.sigmoid(pre[:, 1 * hp:2 * hp])
        c_hat = jnp.tanh(pre[:, 2 * hp:3 * hp])
        T_t = gx[:, 4 * hp:5 * hp]

        c_t = f_t * c_prev + i_t * T_t * c_hat
        gco = jnp.dot(c_t.astype(mm_dtype), wco_ref[...],
                      preferred_element_type=jnp.float32)     # [Bp, Hp]
        o_t = jax.nn.sigmoid(pre[:, 3 * hp:4 * hp] + gco)
        h_t = o_t * jnp.tanh(c_t)

        h_sc[...] = h_t
        c_sc[...] = c_t
        hc_ref[pl.ds(idx, bp), 0:hp] = h_t
        hc_ref[pl.ds(idx, bp), hp:2 * hp] = c_t
        return carry

    jax.lax.fori_loop(0, tt_steps, step, 0, unroll=True)


# ----------------------------------------------------------------------------
# Parameter init (mimics nn.Linear default) and packing.
# Weights stored transposed to [in_features, out_features].
# ----------------------------------------------------------------------------
def init_params(key, input_size, hidden_size):
    names_fans = [
        ("Wxi", input_size), ("Whi", hidden_size),
        ("Wxf", input_size), ("Whf", hidden_size),
        ("Wxt", input_size), ("Wtt", 1),
        ("Wxc", input_size), ("Whc", hidden_size),
        ("Wxo", input_size), ("Wto", 1),
        ("Who", hidden_size), ("Wco", hidden_size),
    ]
    params = {}
    keys = jax.random.split(key, 2 * len(names_fans))
    for idx, (name, fan_in) in enumerate(names_fans):
        bound = 1.0 / (fan_in ** 0.5)
        w = jax.random.uniform(keys[2 * idx], (fan_in, hidden_size),
                               minval=-bound, maxval=bound, dtype=jnp.float32)
        b = jax.random.uniform(keys[2 * idx + 1], (hidden_size,),
                               minval=-bound, maxval=bound, dtype=jnp.float32)
        params[name] = (w, b)
    return params


# Cell kernel gate order: i, f, t, c, o  ->  (x_weight, h_weight, dt_weight)
_CELL_GATES = [
    ("Wxi", "Whi", None),
    ("Wxf", "Whf", None),
    ("Wxt", None, None),     # dt term is inside an inner sigmoid -> separate
    ("Wxc", "Whc", None),
    ("Wxo", "Who", "Wto"),
]

# Sequence kernel recurrent gates (h-dependent): i, f, c, o
_SEQ_GATES4 = [
    ("Wxi", "Whi", None),
    ("Wxf", "Whf", None),
    ("Wxc", "Whc", None),
    ("Wxo", "Who", "Wto"),
]


def _pack_small(params, H, Hp):
    wtt = jnp.zeros((1, Hp), jnp.float32).at[:, :H].set(params["Wtt"][0])
    btt = jnp.zeros((1, Hp), jnp.float32).at[0, :H].set(params["Wtt"][1])
    wco = jnp.zeros((Hp, Hp), jnp.float32).at[:H, :H].set(params["Wco"][0])
    bco = jnp.zeros((1, Hp), jnp.float32).at[0, :H].set(params["Wco"][1])
    return wtt, btt, wco, bco


def pack_cell_params(params, input_size, hidden_size, matmul_dtype=jnp.bfloat16):
    """Pack weights for the single-step cell kernel (fused [Kp, 5*Hp])."""
    I, H = input_size, hidden_size
    Hp = _round_up(H, 128)
    Kp = _round_up(I + H + 1, 128)        # [x | h | dt | pad]

    w_big = jnp.zeros((Kp, 5 * Hp), jnp.float32)
    b_big = jnp.zeros((1, 5 * Hp), jnp.float32)

    for gate, (xn, hn, dn) in enumerate(_CELL_GATES):
        c0 = gate * Hp
        bias = jnp.zeros((H,), jnp.float32)
        wgx, bgx = params[xn]
        w_big = w_big.at[0:I, c0:c0 + H].set(wgx)
        bias = bias + bgx
        if hn is not None:
            wgh, bgh = params[hn]
            w_big = w_big.at[I:I + H, c0:c0 + H].set(wgh)
            bias = bias + bgh
        if dn is not None:
            wgd, bgd = params[dn]
            w_big = w_big.at[I + H:I + H + 1, c0:c0 + H].set(wgd)
            bias = bias + bgd
        b_big = b_big.at[0, c0:c0 + H].set(bias)

    wtt, btt, wco, bco = _pack_small(params, H, Hp)
    return dict(w_big=w_big.astype(matmul_dtype), b_big=b_big,
                wtt=wtt, btt=btt,
                wco=wco.astype(matmul_dtype), bco=bco,
                I=I, H=H, Hp=Hp, Kp=Kp)


def pack_seq_params(params, input_size, hidden_size, matmul_dtype=jnp.bfloat16):
    """Pack weights for the sequence kernel.

    wx : [Ip, 5*Hp]  x/dt projection of gates i,f,c,o (cols 0..4Hp) and the
                     x-side of the T gate (cols 4Hp..5Hp).
    wh : [Hp, 4*Hp]  recurrent projection of gates i,f,c,o only.
    b  : [1, 5*Hp]   all biases; o-gate bias additionally absorbs bto + bco.
    """
    I, H = input_size, hidden_size
    Hp = _round_up(H, 128)
    Ip = _round_up(I + 1, 128)            # [x_t | dt_t | pad]

    wx = jnp.zeros((Ip, 5 * Hp), jnp.float32)
    wh = jnp.zeros((Hp, 4 * Hp), jnp.float32)
    b = jnp.zeros((1, 5 * Hp), jnp.float32)

    for gate, (xn, hn, dn) in enumerate(_SEQ_GATES4):
        c0 = gate * Hp
        wgx, bgx = params[xn]
        wx = wx.at[0:I, c0:c0 + H].set(wgx)
        bias = bgx
        wgh, bgh = params[hn]
        wh = wh.at[0:H, c0:c0 + H].set(wgh)
        bias = bias + bgh
        if dn is not None:
            wgd, bgd = params[dn]
            wx = wx.at[I:I + 1, c0:c0 + H].set(wgd)
            bias = bias + bgd
        b = b.at[0, c0:c0 + H].set(bias)

    # Fold the Wco bias into the o-gate bias (Wco matmul in-kernel has no bias).
    b = b.at[0, 3 * Hp:3 * Hp + H].add(params["Wco"][1])

    # T-gate x-side block (inner sigmoid term handled via wtt/btt in-kernel).
    wx = wx.at[0:I, 4 * Hp:4 * Hp + H].set(params["Wxt"][0])
    b = b.at[0, 4 * Hp:4 * Hp + H].set(params["Wxt"][1])

    wtt, btt, wco, _ = _pack_small(params, H, Hp)
    return dict(wx=wx.astype(matmul_dtype), wh=wh.astype(matmul_dtype), b=b,
                wtt=wtt, btt=btt, wco=wco.astype(matmul_dtype),
                I=I, H=H, Hp=Hp, Ip=Ip)


# ----------------------------------------------------------------------------
# Wrappers
# ----------------------------------------------------------------------------
def time_lstm_cell(x, delta_t, h_prev, c_prev, packed):
    """Single-step forward, identical semantics to TimeLSTMCell.forward."""
    I, H, Hp, Kp = packed["I"], packed["H"], packed["Hp"], packed["Kp"]
    B = x.shape[0]
    Bp = _round_up(B, 8)
    mm_dtype = packed["w_big"].dtype

    dt = delta_t.astype(jnp.float32).reshape(-1, 1)           # matches .view(-1, 1)

    # Lane-aligned fused activation slab z = [x | h_prev | dt | 0], cast to the
    # matmul dtype in the wrapper (gate math stays f32 in-kernel).
    z = jnp.zeros((Bp, Kp), jnp.float32)
    z = z.at[:B, 0:I].set(x.astype(jnp.float32))
    z = z.at[:B, I:I + H].set(h_prev.astype(jnp.float32))
    z = z.at[:B, I + H:I + H + 1].set(dt)
    z = z.astype(mm_dtype)

    dt_p = jnp.zeros((Bp, 1), jnp.float32).at[:B, :].set(dt)
    c_prev_p = jnp.zeros((Bp, Hp), jnp.float32).at[:B, :H].set(
        c_prev.astype(jnp.float32))

    vmem = pl.BlockSpec(memory_space=pltpu.MemorySpace.VMEM)
    kernel = functools.partial(_cell_kernel, hp=Hp)

    hc = pl.pallas_call(
        kernel,
        out_shape=jax.ShapeDtypeStruct((Bp, 2 * Hp), jnp.float32),
        in_specs=[vmem] * 9,
        out_specs=vmem,
    )(z, dt_p, c_prev_p,
      packed["w_big"], packed["b_big"], packed["wtt"], packed["btt"],
      packed["wco"], packed["bco"])

    # TODO(synk): for per-token decode loops, keep h/c/x in the padded
    # [Bp, Hp] layout across calls instead of re-padding / re-slicing here.
    return hc[:B, 0:H], hc[:B, Hp:Hp + H]


def time_lstm_sequence(x_seq, dt_seq, h0, c0, packed, tt_steps=8):
    """Run the cell over a whole sequence inside ONE pallas_call.

    x_seq: [T, B, I], dt_seq: [T, B].  grid=(ceil(T/tt_steps),), tt_steps
    timesteps per grid invocation.  Weights stay resident in VMEM; h/c are
    carried in VMEM scratch.  Returns (h_seq, c_seq), each [T, B, H].
    """
    I, H, Hp, Ip = packed["I"], packed["H"], packed["Hp"], packed["Ip"]
    T, B, _ = x_seq.shape
    Bp = _round_up(B, 8)
    TT = int(tt_steps)
    T_pad = _round_up(T, TT)              # zero-pad tail steps (after the real ones)
    n_chunks = T_pad // TT
    mm_dtype = packed["wx"].dtype
    f32 = jnp.float32

    dt = dt_seq.astype(f32).reshape(T, B, 1)

    # Flattened activation slab [T_pad*Bp, Ip] = [x_t | dt_t | 0], matmul dtype.
    xz = jnp.zeros((T_pad, Bp, Ip), f32)
    xz = xz.at[:T, :B, 0:I].set(x_seq.astype(f32))
    xz = xz.at[:T, :B, I:I + 1].set(dt)
    xz = xz.reshape(T_pad * Bp, Ip).astype(mm_dtype)

    dt_p = jnp.zeros((T_pad, Bp, 1), f32).at[:T, :B, :].set(dt)
    dt_p = dt_p.reshape(T_pad * Bp, 1)

    h0_p = jnp.zeros((Bp, Hp), f32).at[:B, :H].set(h0.astype(f32))
    c0_p = jnp.zeros((Bp, Hp), f32).at[:B, :H].set(c0.astype(f32))

    kernel = functools.partial(_seq_kernel, hp=Hp, bp=Bp, tt_steps=TT)

    # ---- VMEM budget (resident weights ×2 buffers + streamed chunks + scratch)
    def nbytes(a):
        return a.size * jnp.dtype(a.dtype).itemsize
    resident = (nbytes(packed["wx"]) + nbytes(packed["wh"]) + nbytes(packed["b"])
                + nbytes(packed["wtt"]) + nbytes(packed["btt"])
                + nbytes(packed["wco"]) + 2 * Bp * Hp * 4)
    itemsize_mm = jnp.dtype(mm_dtype).itemsize
    streamed = TT * Bp * (Ip * itemsize_mm + 1 * 4 + 2 * Hp * 4)   # xz + dt + (h|c) out
    scratch = (TT * Bp * 5 * Hp + 2 * Bp * Hp) * 4
    vmem_need = 2 * resident + 2 * streamed + scratch
    vmem_limit = int(min(100 << 20, max(32 << 20, int(1.5 * vmem_need) + (1 << 20))))

    bulk_flops = 2 * (TT * Bp) * Ip * 5 * Hp
    step_flops = 2 * Bp * Hp * 5 * Hp     # Wh (4Hp cols) + Wco (Hp cols)
    cost = pl.CostEstimate(
        flops=int(n_chunks * (bulk_flops + TT * step_flops)),
        transcendentals=int(n_chunks * TT * Bp * Hp * 7),
        bytes_accessed=int(resident + n_chunks * streamed))

    grid_spec = pltpu.PrefetchScalarGridSpec(
        num_scalar_prefetch=0,
        grid=(n_chunks,),
        in_specs=[
            pl.BlockSpec((TT * Bp, Ip), lambda c: (c, 0)),     # xz chunk (streamed)
            pl.BlockSpec((TT * Bp, 1), lambda c: (c, 0)),      # dt chunk (streamed)
            pl.BlockSpec((Bp, Hp), lambda c: (0, 0)),          # h0 (resident)
            pl.BlockSpec((Bp, Hp), lambda c: (0, 0)),          # c0 (resident)
            pl.BlockSpec((Ip, 5 * Hp), lambda c: (0, 0)),      # Wx (resident)
            pl.BlockSpec((Hp, 4 * Hp), lambda c: (0, 0)),      # Wh (resident)
            pl.BlockSpec((1, 5 * Hp), lambda c: (0, 0)),       # bias
            pl.BlockSpec((1, Hp), lambda c: (0, 0)),           # Wtt
            pl.BlockSpec((1, Hp), lambda c: (0, 0)),           # btt
            pl.BlockSpec((Hp, Hp), lambda c: (0, 0)),          # Wco (resident)
        ],
        out_specs=pl.BlockSpec((TT * Bp, 2 * Hp), lambda c: (c, 0)),  # (h | c) slab
        scratch_shapes=[
            pltpu.VMEM((TT * Bp, 5 * Hp), jnp.float32),        # per-chunk x-side gates
            pltpu.VMEM((Bp, Hp), jnp.float32),                 # h carry
            pltpu.VMEM((Bp, Hp), jnp.float32),                 # c carry
        ],
    )

    # Note: the time axis is a carried recurrence -> "arbitrary".  A leading
    # batch-block "parallel" axis (v7x dual-TC) is intentionally omitted here.
    hc = pl.pallas_call(
        kernel,
        out_shape=jax.ShapeDtypeStruct((T_pad * Bp, 2 * Hp), jnp.float32),
        grid_spec=grid_spec,
        compiler_params=pltpu.CompilerParams(
            dimension_semantics=("arbitrary",),
            vmem_limit_bytes=vmem_limit),
        cost_estimate=cost,
    )(xz, dt_p, h0_p, c0_p,
      packed["wx"], packed["wh"], packed["b"], packed["wtt"], packed["btt"],
      packed["wco"])

    hc = hc.reshape(T_pad, Bp, 2 * Hp)
    return hc[:T, :B, 0:H], hc[:T, :B, Hp:Hp + H]


# ----------------------------------------------------------------------------
# Pure-JAX references (mirror the PyTorch forward, f32 throughout)
# ----------------------------------------------------------------------------
def time_lstm_cell_ref(x, delta_t, h_prev, c_prev, params):
    def lin(name, v):
        w, b = params[name]
        return v @ w + b
    dt = delta_t.astype(jnp.float32).reshape(-1, 1)
    i_t = jax.nn.sigmoid(lin("Wxi", x) + lin("Whi", h_prev))
    f_t = jax.nn.sigmoid(lin("Wxf", x) + lin("Whf", h_prev))
    T_t = jax.nn.sigmoid(lin("Wxt", x) + jax.nn.sigmoid(lin("Wtt", dt)))
    c_hat = jnp.tanh(lin("Wxc", x) + lin("Whc", h_prev))
    c_t = f_t * c_prev + i_t * T_t * c_hat
    o_t = jax.nn.sigmoid(lin("Wxo", x) + lin("Wto", dt)
                         + lin("Who", h_prev) + lin("Wco", c_t))
    h_t = o_t * jnp.tanh(c_t)
    return h_t, c_t


def time_lstm_sequence_ref(x_seq, dt_seq, h0, c0, params):
    def step(carry, inp):
        h, c = carry
        x_t, dt_t = inp
        h, c = time_lstm_cell_ref(x_t, dt_t, h, c, params)
        return (h, c), (h, c)
    _, (h_seq, c_seq) = jax.lax.scan(step, (h0, c0), (x_seq, dt_seq))
    return h_seq, c_seq


if __name__ == "__main__":
    key = jax.random.PRNGKey(0)
    B, input_size, hidden_size, T = 8, 16, 32, 10

    k_p, k_x, k_dt, k_h, k_c, k_xs, k_dts = jax.random.split(key, 7)
    params = init_params(k_p, input_size, hidden_size)

    # Packed / padded weights (bf16 matmul operands by default; pass
    # matmul_dtype=jnp.float32 for exact-f32 matmuls).
    cell_packed = pack_cell_params(params, input_size, hidden_size)
    seq_packed = pack_seq_params(params, input_size, hidden_size)

    # ---- single-step cell (matches TimeLSTMCell.forward) ----
    x = jax.random.normal(k_x, (B, input_size), dtype=jnp.float32)
    delta_t = jax.random.uniform(k_dt, (B,), dtype=jnp.float32)
    h_prev = jax.random.normal(k_h, (B, hidden_size), dtype=jnp.float32)
    c_prev = jax.random.normal(k_c, (B, hidden_size), dtype=jnp.float32)

    h_t, c_t = time_lstm_cell(x, delta_t, h_prev, c_prev, cell_packed)
    jax.block_until_ready((h_t, c_t))
    h_ref, c_ref = time_lstm_cell_ref(x, delta_t, h_prev, c_prev, params)
    # Tolerances reflect bf16 MXU operands (gate math / carries stay f32).
    assert jnp.allclose(h_t, h_ref, atol=2e-2, rtol=2e-2), \
        float(jnp.max(jnp.abs(h_t - h_ref)))
    assert jnp.allclose(c_t, c_ref, atol=2e-2, rtol=2e-2), \
        float(jnp.max(jnp.abs(c_t - c_ref)))

    # ---- whole sequence inside one kernel (time-blocked grid) ----
    x_seq = jax.random.normal(k_xs, (T, B, input_size), dtype=jnp.float32)
    dt_seq = jax.random.uniform(k_dts, (T, B), dtype=jnp.float32)

    h_seq, c_seq = time_lstm_sequence(x_seq, dt_seq, h_prev, c_prev,
                                      seq_packed, tt_steps=4)
    jax.block_until_ready((h_seq, c_seq))
    h_seq_ref, c_seq_ref = time_lstm_sequence_ref(x_seq, dt_seq, h_prev, c_prev,
                                                  params)
    assert jnp.allclose(h_seq, h_seq_ref, atol=5e-2, rtol=5e-2), \
        float(jnp.max(jnp.abs(h_seq - h_seq_ref)))
    assert jnp.allclose(c_seq, c_seq_ref, atol=5e-2, rtol=5e-2), \
        float(jnp.max(jnp.abs(c_seq - c_seq_ref)))

    print("KERNEL_OK")
</pallas_src>

<mosaic_0001>
module attributes {stable_mosaic.version = 11 : i64} {
  func.func @_cell_kernel(%arg0: memref<8x128xbf16, #tpu.memory_space<vmem>>, %arg1: memref<8x1xf32, #tpu.memory_space<vmem>>, %arg2: memref<8x128xf32, #tpu.memory_space<vmem>>, %arg3: memref<128x640xbf16, #tpu.memory_space<vmem>>, %arg4: memref<1x640xf32, #tpu.memory_space<vmem>>, %arg5: memref<1x128xf32, #tpu.memory_space<vmem>>, %arg6: memref<1x128xf32, #tpu.memory_space<vmem>>, %arg7: memref<128x128xbf16, #tpu.memory_space<vmem>>, %arg8: memref<1x128xf32, #tpu.memory_space<vmem>>, %arg9: memref<8x256xf32, #tpu.memory_space<vmem>>) attributes {dimension_semantics = [], scalar_prefetch = 0 : i64, scratch_operands = 0 : i64, tpu.core_type = #tpu.core_type<tc>} {
    %c0 = arith.constant 0 : index
    %c0_0 = arith.constant 0 : index
    %0 = vector.load %arg0[%c0, %c0_0] : memref<8x128xbf16, #tpu.memory_space<vmem>>, vector<8x128xbf16>
    %c0_1 = arith.constant 0 : index
    %c0_2 = arith.constant 0 : index
    %1 = vector.load %arg1[%c0_1, %c0_2] : memref<8x1xf32, #tpu.memory_space<vmem>>, vector<8x1xf32>
    %c0_3 = arith.constant 0 : index
    %c0_4 = arith.constant 0 : index
    %2 = vector.load %arg2[%c0_3, %c0_4] : memref<8x128xf32, #tpu.memory_space<vmem>>, vector<8x128xf32>
    %c0_5 = arith.constant 0 : index
    %c0_6 = arith.constant 0 : index
    %3 = vector.load %arg3[%c0_5, %c0_6] : memref<128x640xbf16, #tpu.memory_space<vmem>>, vector<128x640xbf16>
    %cst = arith.constant dense<0.000000e+00> : vector<8x640xf32>
    %4 = tpu.matmul %0, %3, %cst {dimension_numbers = #tpu.dot_dimension_numbers<[1], [0], [0], [1], [0, 0, 1, 1], [], []>} : vector<8x128xbf16>, vector<128x640xbf16>, vector<8x640xf32> -> vector<8x640xf32>
    %c0_7 = arith.constant 0 : index
    %c0_8 = arith.constant 0 : index
    %5 = vector.load %arg4[%c0_7, %c0_8] : memref<1x640xf32, #tpu.memory_space<vmem>>, vector<1x640xf32>
    %6 = vector.broadcast %5 : vector<1x640xf32> to vector<8x640xf32>
    %7 = arith.addf %4, %6 : vector<8x640xf32>
    %8 = vector.extract_strided_slice %7 {offsets = [0, 0], sizes = [8, 128], strides = [1, 1]} : vector<8x640xf32> to vector<8x128xf32>
    %9 = vector.extract_strided_slice %7 {offsets = [0, 128], sizes = [8, 128], strides = [1, 1]} : vector<8x640xf32> to vector<8x128xf32>
    %10 = vector.extract_strided_slice %7 {offsets = [0, 256], sizes = [8, 128], strides = [1, 1]} : vector<8x640xf32> to vector<8x128xf32>
    %11 = vector.extract_strided_slice %7 {offsets = [0, 384], sizes = [8, 128], strides = [1, 1]} : vector<8x640xf32> to vector<8x128xf32>
    %12 = vector.extract_strided_slice %7 {offsets = [0, 512], sizes = [8, 128], strides = [1, 1]} : vector<8x640xf32> to vector<8x128xf32>
    %c0_9 = arith.constant 0 : index
    %c0_10 = arith.constant 0 : index
    %13 = vector.load %arg5[%c0_9, %c0_10] : memref<1x128xf32, #tpu.memory_space<vmem>>, vector<1x128xf32>
    %14 = vector.broadcast %1 : vector<8x1xf32> to vector<8x128xf32>
    %15 = vector.broadcast %13 : vector<1x128xf32> to vector<8x128xf32>
    %16 = arith.mulf %14, %15 : vector<8x128xf32>
    %c0_11 = arith.constant 0 : index
    %c0_12 = arith.constant 0 : index
    %17 = vector.load %arg6[%c0_11, %c0_12] : memref<1x128xf32, #tpu.memory_space<vmem>>, vector<1x128xf32>
    %18 = vector.broadcast %17 : vector<1x128xf32> to vector<8x128xf32>
    %19 = arith.addf %16, %18 : vector<8x128xf32>
    %20 = arith.negf %8 : vector<8x128xf32>
    %21 = math.exp %20 : vector<8x128xf32>
    %cst_13 = arith.constant 1.000000e+00 : f32
    %22 = vector.broadcast %cst_13 : f32 to vector<8x128xf32>
    %23 = arith.addf %22, %21 : vector<8x128xf32>
    %24 = arith.divf %22, %23 : vector<8x128xf32>
    %25 = arith.negf %9 : vector<8x128xf32>
    %26 = math.exp %25 : vector<8x128xf32>
    %cst_14 = arith.constant 1.000000e+00 : f32
    %27 = vector.broadcast %cst_14 : f32 to vector<8x128xf32>
    %28 = arith.addf %27, %26 : vector<8x128xf32>
    %29 = arith.divf %27, %28 : vector<8x128xf32>
    %30 = arith.negf %19 : vector<8x128xf32>
    %31 = math.exp %30 : vector<8x128xf32>
    %cst_15 = arith.constant 1.000000e+00 : f32
    %32 = vector.broadcast %cst_15 : f32 to vector<8x128xf32>
    %33 = arith.addf %32, %31 : vector<8x128xf32>
    %34 = arith.divf %32, %33 : vector<8x128xf32>
    %35 = arith.addf %10, %34 : vector<8x128xf32>
    %36 = arith.negf %35 : vector<8x128xf32>
    %37 = math.exp %36 : vector<8x128xf32>
    %cst_16 = arith.constant 1.000000e+00 : f32
    %38 = vector.broadcast %cst_16 : f32 to vector<8x128xf32>
    %39 = arith.addf %38, %37 : vector<8x128xf32>
    %40 = arith.divf %38, %39 : vector<8x128xf32>
    %41 = math.tanh %11 : vector<8x128xf32>
    %42 = arith.mulf %29, %2 : vector<8x128xf32>
    %43 = arith.mulf %24, %40 : vector<8x128xf32>
    %44 = arith.mulf %43, %41 : vector<8x128xf32>
    %45 = arith.addf %42, %44 : vector<8x128xf32>
    %46 = arith.truncf %45 : vector<8x128xf32> to vector<8x128xbf16>
    %c0_17 = arith.constant 0 : index
    %c0_18 = arith.constant 0 : index
    %47 = vector.load %arg7[%c0_17, %c0_18] : memref<128x128xbf16, #tpu.memory_space<vmem>>, vector<128x128xbf16>
    %cst_19 = arith.constant dense<0.000000e+00> : vector<8x128xf32>
    %48 = tpu.matmul %46, %47, %cst_19 {dimension_numbers = #tpu.dot_dimension_numbers<[1], [0], [0], [1], [0, 0, 1, 1], [], []>} : vector<8x128xbf16>, vector<128x128xbf16>, vector<8x128xf32> -> vector<8x128xf32>
    %c0_20 = arith.constant 0 : index
    %c0_21 = arith.constant 0 : index
    %49 = vector.load %arg8[%c0_20, %c0_21] : memref<1x128xf32, #tpu.memory_space<vmem>>, vector<1x128xf32>
    %50 = vector.broadcast %49 : vector<1x128xf32> to vector<8x128xf32>
    %51 = arith.addf %48, %50 : vector<8x128xf32>
    %52 = arith.addf %12, %51 : vector<8x128xf32>
    %53 = arith.negf %52 : vector<8x128xf32>
    %54 = math.exp %53 : vector<8x128xf32>
    %cst_22 = arith.constant 1.000000e+00 : f32
    %55 = vector.broadcast %cst_22 : f32 to vector<8x128xf32>
    %56 = arith.addf %55, %54 : vector<8x128xf32>
    %57 = arith.divf %55, %56 : vector<8x128xf32>
    %58 = math.tanh %45 : vector<8x128xf32>
    %59 = arith.mulf %57, %58 : vector<8x128xf32>
    %c0_23 = arith.constant 0 : index
    %c0_24 = arith.constant 0 : index
    %60 = vector.load %arg9[%c0_23, %c0_24] : memref<8x256xf32, #tpu.memory_space<vmem>>, vector<8x128xf32>
    tpu.vector_store %arg9[%c0_23, %c0_24], %59 {strides = array<i32>} : memref<8x256xf32, #tpu.memory_space<vmem>>, vector<8x128xf32>,
    %c0_25 = arith.constant 0 : index
    %c128 = arith.constant 128 : index
    %61 = vector.load %arg9[%c0_25, %c128] : memref<8x256xf32, #tpu.memory_space<vmem>>, vector<8x128xf32>
    tpu.vector_store %arg9[%c0_25, %c128], %45 {strides = array<i32>} : memref<8x256xf32, #tpu.memory_space<vmem>>, vector<8x128xf32>,
    return
  }
}

</mosaic_0001>

<llo_original>
// kernel: tpu_custom_call.1
$region0: #{tpu_custom_call.1}
  #allocation0 [shape = 'u32[]', space=smem, size = 0x4, offset = 0x4, fixed_abs, tag = 'smem constant byte address 0x4 - core index']
  #allocation1 [shape = 'u32[144,128]{1,0:T(1,128)}', space=vmem, size = 0x12000, scoped, tag = 'internal scratch']
  %s0 = inlined_call_operand.hbm [shape: bf16[8,128], index: 0, kind: input, shape index: {}]
  %s1 = inlined_call_operand.vmem [shape: f32[8,1], index: 1, kind: input, shape index: {}]
  %s2 = inlined_call_operand.vmem [shape: f32[8,128], index: 2, kind: input, shape index: {}]
  %s3 = inlined_call_operand.hbm [shape: bf16[128,640], index: 3, kind: input, shape index: {}]
  %s4 = inlined_call_operand.vmem [shape: f32[1,640], index: 4, kind: input, shape index: {}]
  %s5 = inlined_call_operand.vmem [shape: f32[1,128], index: 5, kind: input, shape index: {}]
  %s6 = inlined_call_operand.vmem [shape: f32[1,128], index: 6, kind: input, shape index: {}]
  %s7 = inlined_call_operand.hbm [shape: bf16[128,128], index: 7, kind: input, shape index: {}]
  %s8 = inlined_call_operand.vmem [shape: f32[1,128], index: 8, kind: input, shape index: {}]
  %s9 = inlined_call_operand.hbm [shape: f32[8,256], index: 9, kind: output, shape index: {}]
  %s10 = sld [smem:[#allocation0]]
  $region58: #{tpu_custom_call.1} parent=0
    _
  %s12 = ssub.s32 1, %s10
  %s13 = scalar_select 0, %s12, %s10
  $region1: #{tpu_custom_call.1} parent=0
    #allocation2 [shape = 'u8[2048]{0}', space=vmem, size = 0x800, scoped, tag = 'input window, operand 0, single buffered']
    #allocation3 [shape = 's32[1]{0}', space=sflag, size = 0x4, scoped, tag = 'scoped memory for tpu_custom_call.1']
    #allocation4 [shape = 's32[1]{0}', space=sflag, size = 0x4, scoped, tag = 'scoped memory for tpu_custom_call.1']
    #allocation5 [shape = 'u8[163840]{0}', space=vmem, size = 0x28000, scoped, tag = 'input window, operand 3, single buffered']
    #allocation6 [shape = 's32[1]{0}', space=sflag, size = 0x4, scoped, tag = 'scoped memory for tpu_custom_call.1']
    #allocation7 [shape = 'u8[32768]{0}', space=vmem, size = 0x8000, scoped, tag = 'input window, operand 7, single buffered']
    #allocation8 [shape = 'u8[8192]{0}', space=vmem, size = 0x2000, scoped, tag = 'output window, operand 0, single buffered']
    %14 = vsyncpa [#allocation3], 0
    %15 = vsyncpa [#allocation6], 0
    %16 = vsyncpa [#allocation4], 0
    // Predicated region
    $region2: #{tpu_custom_call.1} parent=1 // pred_check
      _
    $region3: #{tpu_custom_call.1} parent=1 // pred_check_branch
      %18 = sbr.rel (0) target = $region5
    $region4: #{tpu_custom_call.1} parent=1 // pred_region
      %s20 = ssub.s32 64, 64
      %21 = vsyncadd [#allocation3], %s20
      %s23 = sshll.u32 [#allocation2], 4
      %s24 = int_to_ptr.vmem [resolvable:$true] %s23
      %26 = dma.hbm_to_vmem [thread:$0]  %s0, 64, %s24, [#allocation3]
    $region5: #{tpu_custom_call.1} parent=1 // pred_fallthru
      _
    // Predicated region
    $region6: #{tpu_custom_call.1} parent=1 // pred_check
      _
    $region7: #{tpu_custom_call.1} parent=1 // pred_check_branch
      %28 = sbr.rel (0) target = $region9
    $region8: #{tpu_custom_call.1} parent=1 // pred_region
      _
    $region9: #{tpu_custom_call.1} parent=1 // pred_fallthru
      _
    // Predicated region
    $region10: #{tpu_custom_call.1} parent=1 // pred_check
      _
    $region11: #{tpu_custom_call.1} parent=1 // pred_check_branch
      %30 = sbr.rel (0) target = $region13
    $region12: #{tpu_custom_call.1} parent=1 // pred_region
      _
    $region13: #{tpu_custom_call.1} parent=1 // pred_fallthru
      _
    // Predicated region
    $region14: #{tpu_custom_call.1} parent=1 // pred_check
      _
    $region15: #{tpu_custom_call.1} parent=1 // pred_check_branch
      %32 = sbr.rel (0) target = $region17
    $region16: #{tpu_custom_call.1} parent=1 // pred_region
      %s34 = ssub.s32 5120, 5120
      %35 = vsyncadd [#allocation6], %s34
      %s36 = sshll.u32 [#allocation5], 4
      %s37 = int_to_ptr.vmem [resolvable:$true] %s36
      %42 = dma.hbm_to_vmem [thread:$0]  %s3, 5120, %s37, [#allocation6], 320, 320, 20
    $region17: #{tpu_custom_call.1} parent=1 // pred_fallthru
      _
    // Predicated region
    $region18: #{tpu_custom_call.1} parent=1 // pred_check
      _
    $region19: #{tpu_custom_call.1} parent=1 // pred_check_branch
      %44 = sbr.rel (0) target = $region21
    $region20: #{tpu_custom_call.1} parent=1 // pred_region
      _
    $region21: #{tpu_custom_call.1} parent=1 // pred_fallthru
      _
    // Predicated region
    $region22: #{tpu_custom_call.1} parent=1 // pred_check
      _
    $region23: #{tpu_custom_call.1} parent=1 // pred_check_branch
      %46 = sbr.rel (0) target = $region25
    $region24: #{tpu_custom_call.1} parent=1 // pred_region
      _
    $region25: #{tpu_custom_call.1} parent=1 // pred_fallthru
      _
    // Predicated region
    $region26: #{tpu_custom_call.1} parent=1 // pred_check
      _
    $region27: #{tpu_custom_call.1} parent=1 // pred_check_branch
      %48 = sbr.rel (0) target = $region29
    $region28: #{tpu_custom_call.1} parent=1 // pred_region
      _
    $region29: #{tpu_custom_call.1} parent=1 // pred_fallthru
      _
    // Predicated region
    $region30: #{tpu_custom_call.1} parent=1 // pred_check
      _
    $region31: #{tpu_custom_call.1} parent=1 // pred_check_branch
      %50 = sbr.rel (0) target = $region33
    $region32: #{tpu_custom_call.1} parent=1 // pred_region
      %s52 = ssub.s32 1024, 1024
      %53 = vsyncadd [#allocation6], %s52
      %s54 = sshll.u32 [#allocation7], 4
      %s55 = int_to_ptr.vmem [resolvable:$true] %s54
      %60 = dma.hbm_to_vmem [thread:$0]  %s7, 1024, %s55, [#allocation6], 64, 64, 4
    $region33: #{tpu_custom_call.1} parent=1 // pred_fallthru
      _
    // Predicated region
    $region34: #{tpu_custom_call.1} parent=1 // pred_check
      _
    $region35: #{tpu_custom_call.1} parent=1 // pred_check_branch
      %62 = sbr.rel (0) target = $region37
    $region36: #{tpu_custom_call.1} parent=1 // pred_region
      _
    $region37: #{tpu_custom_call.1} parent=1 // pred_fallthru
      _
    // Predicated region
    $region38: #{tpu_custom_call.1} parent=1 // pred_check
      _
    $region39: #{tpu_custom_call.1} parent=1 // pred_check_branch
      %64 = sbr.rel (0) target = $region41
    $region40: #{tpu_custom_call.1} parent=1 // pred_region
      %65 = dma.done [#allocation3], 64
    $region41: #{tpu_custom_call.1} parent=1 // pred_fallthru
      _
    // Predicated region
    $region42: #{tpu_custom_call.1} parent=1 // pred_check
      _
    $region43: #{tpu_custom_call.1} parent=1 // pred_check_branch
      %67 = sbr.rel (0) target = $region45
    $region44: #{tpu_custom_call.1} parent=1 // pred_region
      %68 = dma.done [#allocation6], 5120
    $region45: #{tpu_custom_call.1} parent=1 // pred_fallthru
      _
    // Predicated region
    $region46: #{tpu_custom_call.1} parent=1 // pred_check
      _
    $region47: #{tpu_custom_call.1} parent=1 // pred_check_branch
      %70 = sbr.rel (0) target = $region49
    $region48: #{tpu_custom_call.1} parent=1 // pred_region
      %71 = dma.done [#allocation6], 1024
    $region49: #{tpu_custom_call.1} parent=1 // pred_fallthru
      _
    %v73 = vld [vmem:[#allocation2] sm:$0xf]
    %v74 = vld [vmem:[%s1] sm:$0xff]
    %v75 = vld [vmem:[%s2] sm:$0xff]
    %v76 = vld [vmem:[#allocation5] sm:$0xff]
    %v77 = vld [vmem:[#allocation5 + $0x8] sm:$0xff]
    %v78 = vld [vmem:[#allocation5 + $0x10] sm:$0xf]
    %v79 = vld [vmem:[#allocation5 + $0x14] sm:$0xff]
    %v80 = vld [vmem:[#allocation5 + $0x1c] sm:$0xff]
    %v81 = vld [vmem:[#allocation5 + $0x24] sm:$0xf]
    %v82 = vld [vmem:[#allocation5 + $0x28] sm:$0xff]
    %v83 = vld [vmem:[#allocation5 + $0x30] sm:$0xff]
    %v84 = vld [vmem:[#allocation5 + $0x38] sm:$0xf]
    %v85 = vld [vmem:[#allocation5 + $0x3c] sm:$0xff]
    %v86 = vld [vmem:[#allocation5 + $0x44] sm:$0xff]
    %v87 = vld [vmem:[#allocation5 + $0x4c] sm:$0xf]
    %v88 = vld [vmem:[#allocation5 + $0x50] sm:$0xff]
    %v89 = vld [vmem:[#allocation5 + $0x58] sm:$0xff]
    %v90 = vld [vmem:[#allocation5 + $0x60] sm:$0xf]
    %v91 = vld [vmem:[#allocation5 + $0x64] sm:$0xff]
    %v92 = vld [vmem:[#allocation5 + $0x6c] sm:$0xff]
    %v93 = vld [vmem:[#allocation5 + $0x74] sm:$0xf]
    %v94 = vld [vmem:[#allocation5 + $0x78] sm:$0xff]
    %v95 = vld [vmem:[#allocation5 + $0x80] sm:$0xff]
    %v96 = vld [vmem:[#allocation5 + $0x88] sm:$0xf]
    %v97 = vld [vmem:[#allocation5 + $0x8c] sm:$0xff]
    %v98 = vld [vmem:[#allocation5 + $0x94] sm:$0xff]
    %v99 = vld [vmem:[#allocation5 + $0x9c] sm:$0xf]
    %v100 = vld [vmem:[#allocation5 + $0xa0] sm:$0xff]
    %v101 = vld [vmem:[#allocation5 + $0xa8] sm:$0xff]
    %v102 = vld [vmem:[#allocation5 + $0xb0] sm:$0xf]
    %v103 = vld [vmem:[#allocation5 + $0xb4] sm:$0xff]
    %v104 = vld [vmem:[#allocation5 + $0xbc] sm:$0xff]
    %v105 = vld [vmem:[#allocation5 + $0xc4] sm:$0xf]
    %v106 = vld [vmem:[#allocation5 + $0xc8] sm:$0xff]
    %v107 = vld [vmem:[#allocation5 + $0xd0] sm:$0xff]
    %v108 = vld [vmem:[#allocation5 + $0xd8] sm:$0xf]
    %v109 = vld [vmem:[#allocation5 + $0xdc] sm:$0xff]
    %v110 = vld [vmem:[#allocation5 + $0xe4] sm:$0xff]
    %v111 = vld [vmem:[#allocation5 + $0xec] sm:$0xf]
    %v112 = vld [vmem:[#allocation5 + $0xf0] sm:$0xff]
    %v113 = vld [vmem:[#allocation5 + $0xf8] sm:$0xff]
    %v114 = vld [vmem:[#allocation5 + $0x100] sm:$0xf]
    %v115 = vld [vmem:[#allocation5 + $0x104] sm:$0xff]
    %v116 = vld [vmem:[#allocation5 + $0x10c] sm:$0xff]
    %v117 = vld [vmem:[#allocation5 + $0x114] sm:$0xf]
    %v118 = vld [vmem:[#allocation5 + $0x118] sm:$0xff]
    %v119 = vld [vmem:[#allocation5 + $0x120] sm:$0xff]
    %v120 = vld [vmem:[#allocation5 + $0x128] sm:$0xf]
    %v121 = vld [vmem:[#allocation5 + $0x12c] sm:$0xff]
    %v122 = vld [vmem:[#allocation5 + $0x134] sm:$0xff]
    %v123 = vld [vmem:[#allocation5 + $0x13c] sm:$0xf]
    %v124 = vld [vmem:[%s4] sm:$0x1f]
    %v126 = vlaneseq
    %v127 = vshrl.u32 %v126, 7
    %v128 = vsub.s32 0, %v127
    %v129 = vrot.slane %v124, %v128
    %v130 = vlaneseq
    %v131 = vshrl.u32 %v130, 7
    %v132 = vsub.s32 1, %v131
    %v133 = vrot.slane %v124, %v132
    %v134 = vlaneseq
    %v135 = vshrl.u32 %v134, 7
    %v136 = vsub.s32 2, %v135
    %v137 = vrot.slane %v124, %v136
    %v138 = vlaneseq
    %v139 = vshrl.u32 %v138, 7
    %v140 = vsub.s32 3, %v139
    %v141 = vrot.slane %v124, %v140
    %v142 = vlaneseq
    %v143 = vshrl.u32 %v142, 7
    %v144 = vsub.s32 4, %v143
    %v145 = vrot.slane %v124, %v144
    %v199 = vunpack.c.l.b16 %v76
    %v200 = vunpack.c.h.b16 %v76
    %v201 = vunpack.c.l.b16 %v77
    %v202 = vunpack.c.h.b16 %v77
    %v203 = vunpack.c.l.b16 %v78
    %v204 = vunpack.c.l.b16 %v79
    %v205 = vunpack.c.h.b16 %v79
    %v206 = vunpack.c.l.b16 %v80
    %v207 = vunpack.c.h.b16 %v80
    %v208 = vunpack.c.l.b16 %v81
    %v209 = vunpack.c.l.b16 %v82
    %v210 = vunpack.c.h.b16 %v82
    %v211 = vunpack.c.l.b16 %v83
    %v212 = vunpack.c.h.b16 %v83
    %v213 = vunpack.c.l.b16 %v84
    %v214 = vunpack.c.l.b16 %v85
    %v215 = vunpack.c.h.b16 %v85
    %v216 = vunpack.c.l.b16 %v86
    %v217 = vunpack.c.h.b16 %v86
    %v218 = vunpack.c.l.b16 %v87
    %v219 = vunpack.c.l.b16 %v88
    %v220 = vunpack.c.h.b16 %v88
    %v221 = vunpack.c.l.b16 %v89
    %v222 = vunpack.c.h.b16 %v89
    %v223 = vunpack.c.l.b16 %v90
    %v224 = vunpack.c.l.b16 %v91
    %v225 = vunpack.c.h.b16 %v91
    %v226 = vunpack.c.l.b16 %v92
    %v227 = vunpack.c.h.b16 %v92
    %v228 = vunpack.c.l.b16 %v93
    %v229 = vunpack.c.l.b16 %v94
    %v230 = vunpack.c.h.b16 %v94
    %v231 = vunpack.c.l.b16 %v95
    %v232 = vunpack.c.h.b16 %v95
    %v233 = vunpack.c.l.b16 %v96
    %v234 = vunpack.c.l.b16 %v97
    %v235 = vunpack.c.h.b16 %v97
    %v236 = vunpack.c.l.b16 %v98
    %v237 = vunpack.c.h.b16 %v98
    %v238 = vunpack.c.l.b16 %v99
    %v239 = vunpack.c.l.b16 %v100
    %v240 = vunpack.c.h.b16 %v100
    %v241 = vunpack.c.l.b16 %v101
    %v242 = vunpack.c.h.b16 %v101
    %v243 = vunpack.c.l.b16 %v102
    %v244 = vunpack.c.l.b16 %v103
    %v245 = vunpack.c.h.b16 %v103
    %v246 = vunpack.c.l.b16 %v104
    %v247 = vunpack.c.h.b16 %v104
    %v248 = vunpack.c.l.b16 %v105
    %v249 = vunpack.c.l.b16 %v106
    %v250 = vunpack.c.h.b16 %v106
    %v251 = vunpack.c.l.b16 %v107
    %v252 = vunpack.c.h.b16 %v107
    %v253 = vunpack.c.l.b16 %v108
    %v254 = vunpack.c.l.b16 %v109
    %v255 = vunpack.c.h.b16 %v109
    %v256 = vunpack.c.l.b16 %v110
    %v257 = vunpack.c.h.b16 %v110
    %v258 = vunpack.c.l.b16 %v111
    %v259 = vunpack.c.l.b16 %v112
    %v260 = vunpack.c.h.b16 %v112
    %v261 = vunpack.c.l.b16 %v113
    %v262 = vunpack.c.h.b16 %v113
    %v263 = vunpack.c.l.b16 %v114
    %v264 = vunpack.c.l.b16 %v115
    %v265 = vunpack.c.h.b16 %v115
    %v266 = vunpack.c.l.b16 %v116
    %v267 = vunpack.c.h.b16 %v116
    %v268 = vunpack.c.l.b16 %v117
    %v269 = vunpack.c.l.b16 %v118
    %v270 = vunpack.c.h.b16 %v118
    %v271 = vunpack.c.l.b16 %v119
    %v272 = vunpack.c.h.b16 %v119
    %v273 = vunpack.c.l.b16 %v120
    %v274 = vunpack.c.l.b16 %v121
    %v275 = vunpack.c.h.b16 %v121
    %v276 = vunpack.c.l.b16 %v122
    %v277 = vunpack.c.h.b16 %v122
    %v278 = vunpack.c.l.b16 %v123
    %v279 = vpack.c.b16 %v204, %v199
    %v280 = vpack.c.b16 %v205, %v200
    %v281 = vpack.c.b16 %v206, %v201
    %v282 = vpack.c.b16 %v207, %v202
    %v283 = vpack.c.b16 %v208, %v203
    %v284 = vpack.c.b16 %v214, %v209
    %v285 = vpack.c.b16 %v215, %v210
    %v286 = vpack.c.b16 %v216, %v211
    %v287 = vpack.c.b16 %v217, %v212
    %v288 = vpack.c.b16 %v218, %v213
    %v289 = vpack.c.b16 %v224, %v219
    %v290 = vpack.c.b16 %v225, %v220
    %v291 = vpack.c.b16 %v226, %v221
    %v292 = vpack.c.b16 %v227, %v222
    %v293 = vpack.c.b16 %v228, %v223
    %v294 = vpack.c.b16 %v234, %v229
    %v295 = vpack.c.b16 %v235, %v230
    %v296 = vpack.c.b16 %v236, %v231
    %v297 = vpack.c.b16 %v237, %v232
    %v298 = vpack.c.b16 %v238, %v233
    %v299 = vpack.c.b16 %v244, %v239
    %v300 = vpack.c.b16 %v245, %v240
    %v301 = vpack.c.b16 %v246, %v241
    %v302 = vpack.c.b16 %v247, %v242
    %v303 = vpack.c.b16 %v248, %v243
    %v304 = vpack.c.b16 %v254, %v249
    %v305 = vpack.c.b16 %v255, %v250
    %v306 = vpack.c.b16 %v256, %v251
    %v307 = vpack.c.b16 %v257, %v252
    %v308 = vpack.c.b16 %v258, %v253
    %v309 = vpack.c.b16 %v264, %v259
    %v310 = vpack.c.b16 %v265, %v260
    %v311 = vpack.c.b16 %v266, %v261
    %v312 = vpack.c.b16 %v267, %v262
    %v313 = vpack.c.b16 %v268, %v263
    %v314 = vpack.c.b16 %v274, %v269
    %v315 = vpack.c.b16 %v275, %v270
    %v316 = vpack.c.b16 %v276, %v271
    %v317 = vpack.c.b16 %v277, %v272
    %v318 = vpack.c.b16 %v278, %v273
    %359 = vmatprep.subr.bf16.mxu0 %v315
    %360 = vmatpush1.bf16.msra.mxu0 %v314
    %361 = vmatprep.subr.bf16.mxu0 %v310
    %362 = vmatpush1.bf16.msra.mxu0 %v309
    %363 = vmatprep.subr.bf16.mxu0 %v305
    %364 = vmatpush1.bf16.msra.mxu0 %v304
    %365 = vmatprep.subr.bf16.mxu0 %v300
    %366 = vmatpush1.bf16.msra.mxu0 %v299
    %367 = vmatprep.subr.bf16.mxu0 %v295
    %368 = vmatpush1.bf16.msra.mxu0 %v294
    %369 = vmatprep.subr.bf16.mxu0 %v290
    %370 = vmatpush1.bf16.msra.mxu0 %v289
    %371 = vmatprep.subr.bf16.mxu0 %v285
    %372 = vmatpush1.bf16.msra.mxu0 %v284
    %373 = vmatprep.subr.bf16.mxu0 %v280
    %374 = vmatpush1.bf16.msra.mxu0 %v279
    %375 = vmatprep.subr.bf16.mxu0 0
    %376 = vmatpush2.bf16.msra.mxu0 0
    %377 = vmatprep.subr.bf16.mxu0 0
    %378 = vmatpush2.bf16.msra.mxu0 0
    %379 = vmatprep.subr.bf16.mxu0 0
    %380 = vmatpush2.bf16.msra.mxu0 0
    %381 = vmatprep.subr.bf16.mxu0 0
    %382 = vmatpush2.bf16.msra.mxu0 0
    %383 = vmatprep.subr.bf16.mxu0 0
    %384 = vmatpush2.bf16.msra.mxu0 0
    %385 = vmatprep.subr.bf16.mxu0 0
    %386 = vmatpush2.bf16.msra.mxu0 0
    %387 = vmatprep.subr.bf16.mxu0 0
    %388 = vmatpush2.bf16.msra.mxu0 0
    %389 = vmatprep.subr.bf16.mxu0 0
    %390 = vmatpush2.bf16.msra.mxu0 0
    %391 = vmatprep.mubr.bf16.mxu0 0
    %392 = vmatmul.mubr.bf16.gmra.mxu0 %v73
    %v393 = vpop.f32.mrf.mxu0
    %v394 = vadd.f32 %v129, %v393
    %v395 = vpop.f32.mrf.mxu0
    %v396 = vadd.f32 %v133, %v395
    %v397 = vpop.f32.mrf.mxu0
    %v398 = vpop.f32.mrf.mxu0
    %399 = vdwg.mxu0
    %400 = vmatprep.subr.bf16.mxu0 %v317
    %401 = vmatpush1.bf16.msra.mxu0 %v316
    %402 = vmatprep.subr.bf16.mxu0 %v312
    %403 = vmatpush1.bf16.msra.mxu0 %v311
    %404 = vmatprep.subr.bf16.mxu0 %v307
    %405 = vmatpush1.bf16.msra.mxu0 %v306
    %406 = vmatprep.subr.bf16.mxu0 %v302
    %407 = vmatpush1.bf16.msra.mxu0 %v301
    %408 = vmatprep.subr.bf16.mxu0 %v297
    %409 = vmatpush1.bf16.msra.mxu0 %v296
    %410 = vmatprep.subr.bf16.mxu0 %v292
    %411 = vmatpush1.bf16.msra.mxu0 %v291
    %412 = vmatprep.subr.bf16.mxu0 %v287
    %413 = vmatpush1.bf16.msra.mxu0 %v286
    %414 = vmatprep.subr.bf16.mxu0 %v282
    %415 = vmatpush1.bf16.msra.mxu0 %v281
    %416 = vmatprep.subr.bf16.mxu0 0
    %417 = vmatpush2.bf16.msra.mxu0 0
    %418 = vmatprep.subr.bf16.mxu0 0
    %419 = vmatpush2.bf16.msra.mxu0 0
    %420 = vmatprep.subr.bf16.mxu0 0
    %421 = vmatpush2.bf16.msra.mxu0 0
    %422 = vmatprep.subr.bf16.mxu0 0
    %423 = vmatpush2.bf16.msra.mxu0 0
    %424 = vmatprep.subr.bf16.mxu0 0
    %425 = vmatpush2.bf16.msra.mxu0 0
    %426 = vmatprep.subr.bf16.mxu0 0
    %427 = vmatpush2.bf16.msra.mxu0 0
    %428 = vmatprep.subr.bf16.mxu0 0
    %429 = vmatpush2.bf16.msra.mxu0 0
    %430 = vmatprep.subr.bf16.mxu0 0
    %431 = vmatpush2.bf16.msra.mxu0 0
    %432 = vmatprep.mubr.bf16.mxu0 0
    %433 = vmatmul.mubr.bf16.gmra.mxu0 %v73
    %v434 = vpop.f32.mrf.mxu0
    %v435 = vadd.f32 %v137, %v434
    %v436 = vpop.f32.mrf.mxu0
    %v437 = vadd.f32 %v141, %v436
    %v438 = vpop.f32.mrf.mxu0
    %v439 = vpop.f32.mrf.mxu0
    %440 = vdwg.mxu0
    %441 = vmatprep.subr.bf16.mxu0 0
    %442 = vmatpush1.bf16.msra.mxu0 %v318
    %443 = vmatprep.subr.bf16.mxu0 0
    %444 = vmatpush1.bf16.msra.mxu0 %v313
    %445 = vmatprep.subr.bf16.mxu0 0
    %446 = vmatpush1.bf16.msra.mxu0 %v308
    %447 = vmatprep.subr.bf16.mxu0 0
    %448 = vmatpush1.bf16.msra.mxu0 %v303
    %449 = vmatprep.subr.bf16.mxu0 0
    %450 = vmatpush1.bf16.msra.mxu0 %v298
    %451 = vmatprep.subr.bf16.mxu0 0
    %452 = vmatpush1.bf16.msra.mxu0 %v293
    %453 = vmatprep.subr.bf16.mxu0 0
    %454 = vmatpush1.bf16.msra.mxu0 %v288
    %455 = vmatprep.subr.bf16.mxu0 0
    %456 = vmatpush1.bf16.msra.mxu0 %v283
    %457 = vmatprep.subr.bf16.mxu0 0
    %458 = vmatpush2.bf16.msra.mxu0 0
    %459 = vmatprep.subr.bf16.mxu0 0
    %460 = vmatpush2.bf16.msra.mxu0 0
    %461 = vmatprep.subr.bf16.mxu0 0
    %462 = vmatpush2.bf16.msra.mxu0 0
    %463 = vmatprep.subr.bf16.mxu0 0
    %464 = vmatpush2.bf16.msra.mxu0 0
    %465 = vmatprep.subr.bf16.mxu0 0
    %466 = vmatpush2.bf16.msra.mxu0 0
    %467 = vmatprep.subr.bf16.mxu0 0
    %468 = vmatpush2.bf16.msra.mxu0 0
    %469 = vmatprep.subr.bf16.mxu0 0
    %470 = vmatpush2.bf16.msra.mxu0 0
    %471 = vmatprep.subr.bf16.mxu0 0
    %472 = vmatpush2.bf16.msra.mxu0 0
    %473 = vmatprep.mubr.bf16.mxu0 0
    %474 = vmatmul.mubr.bf16.gmra.mxu0 %v73
    %v475 = vpop.f32.mrf.mxu0
    %v476 = vadd.f32 %v145, %v475
    %v477 = vpop.f32.mrf.mxu0
    %v478 = vpop.f32.mrf.mxu0
    %v479 = vpop.f32.mrf.mxu0
    %480 = vdwg.mxu0
    %v481 = vld [vmem:[%s5] sm:$0x1]
    %483 = vset.pattern.permute.xlu0 0
    %484 = vperm.xlu0 %483, %v74
    %v485 = vpop.permute.xlu0 %484
    %v488 = vlaneseq
    %v489 = vshrl.u32 %v488, 7
    %v490 = vsub.s32 0, %v489
    %v491 = vrot.slane %v481, %v490
    %v493 = vmul.f32 %v485, %v491
    %v494 = vld [vmem:[%s6] sm:$0x1]
    %v496 = vlaneseq
    %v497 = vshrl.u32 %v496, 7
    %v498 = vsub.s32 0, %v497
    %v499 = vrot.slane %v494, %v498
    %v501 = vadd.f32 %v493, %v499
    %v502 = vxor.u32 %v394, 2147483648
    %v503 = vmul.f32 %v502, 1.442695
    %v504 = vpow.pop %v503
    %v505 = vadd.f32 %v504, 1.0
    %v506 = vrcp.pop %v505
    %v507 = vmul.f32 1.0, %v506
    %v508 = vxor.u32 %v396, 2147483648
    %v509 = vmul.f32 %v508, 1.442695
    %v510 = vpow.pop %v509
    %v511 = vadd.f32 %v510, 1.0
    %v512 = vrcp.pop %v511
    %v513 = vmul.f32 1.0, %v512
    %v514 = vxor.u32 %v501, 2147483648
    %v515 = vmul.f32 %v514, 1.442695
    %v516 = vpow.pop %v515
    %v517 = vadd.f32 %v516, 1.0
    %v518 = vrcp.pop %v517
    %v519 = vmul.f32 1.0, %v518
    %v520 = vadd.f32 %v435, %v519
    %v521 = vxor.u32 %v520, 2147483648
    %v522 = vmul.f32 %v521, 1.442695
    %v523 = vpow.pop %v522
    %v524 = vadd.f32 %v523, 1.0
    %v525 = vrcp.pop %v524
    %v526 = vmul.f32 1.0, %v525
    %v527 = vtanh.pop %v437
    %v528 = vmul.f32 %v513, %v75
    %v529 = vmul.f32 %v507, %v526
    %v530 = vmul.f32 %v529, %v527
    %v531 = vadd.f32 %v528, %v530
    %v532 = vpack.c.bf16 %v531, %v531
    %v533 = vld [vmem:[#allocation7] sm:$0xf]
    %v534 = vld [vmem:[#allocation7 + $0x4] sm:$0xf]
    %v535 = vld [vmem:[#allocation7 + $0x8] sm:$0xf]
    %v536 = vld [vmem:[#allocation7 + $0xc] sm:$0xf]
    %v537 = vld [vmem:[#allocation7 + $0x10] sm:$0xf]
    %v538 = vld [vmem:[#allocation7 + $0x14] sm:$0xf]
    %v539 = vld [vmem:[#allocation7 + $0x18] sm:$0xf]
    %v540 = vld [vmem:[#allocation7 + $0x1c] sm:$0xf]
    %v541 = vld [vmem:[#allocation7 + $0x20] sm:$0xf]
    %v542 = vld [vmem:[#allocation7 + $0x24] sm:$0xf]
    %v543 = vld [vmem:[#allocation7 + $0x28] sm:$0xf]
    %v544 = vld [vmem:[#allocation7 + $0x2c] sm:$0xf]
    %v545 = vld [vmem:[#allocation7 + $0x30] sm:$0xf]
    %v546 = vld [vmem:[#allocation7 + $0x34] sm:$0xf]
    %v547 = vld [vmem:[#allocation7 + $0x38] sm:$0xf]
    %v548 = vld [vmem:[#allocation7 + $0x3c] sm:$0xf]
    %v549 = vld [vmem:[%s8] sm:$0x1]
    %v551 = vlaneseq
    %v552 = vshrl.u32 %v551, 7
    %v553 = vsub.s32 0, %v552
    %v554 = vrot.slane %v549, %v553
    %v572 = vunpack.c.l.b16 %v533
    %v573 = vunpack.c.l.b16 %v534
    %v574 = vunpack.c.l.b16 %v535
    %v575 = vunpack.c.l.b16 %v536
    %v576 = vunpack.c.l.b16 %v537
    %v577 = vunpack.c.l.b16 %v538
    %v578 = vunpack.c.l.b16 %v539
    %v579 = vunpack.c.l.b16 %v540
    %v580 = vunpack.c.l.b16 %v541
    %v581 = vunpack.c.l.b16 %v542
    %v582 = vunpack.c.l.b16 %v543
    %v583 = vunpack.c.l.b16 %v544
    %v584 = vunpack.c.l.b16 %v545
    %v585 = vunpack.c.l.b16 %v546
    %v586 = vunpack.c.l.b16 %v547
    %v587 = vunpack.c.l.b16 %v548
    %v588 = vpack.c.b16 %v573, %v572
    %v589 = vpack.c.b16 %v575, %v574
    %v590 = vpack.c.b16 %v577, %v576
    %v591 = vpack.c.b16 %v579, %v578
    %v592 = vpack.c.b16 %v581, %v580
    %v593 = vpack.c.b16 %v583, %v582
    %v594 = vpack.c.b16 %v585, %v584
    %v595 = vpack.c.b16 %v587, %v586
    %604 = vmatprep.subr.bf16.mxu0 0
    %605 = vmatpush1.bf16.msra.mxu0 %v595
    %606 = vmatprep.subr.bf16.mxu0 0
    %607 = vmatpush1.bf16.msra.mxu0 %v594
    %608 = vmatprep.subr.bf16.mxu0 0
    %609 = vmatpush1.bf16.msra.mxu0 %v593
    %610 = vmatprep.subr.bf16.mxu0 0
    %611 = vmatpush1.bf16.msra.mxu0 %v592
    %612 = vmatprep.subr.bf16.mxu0 0
    %613 = vmatpush1.bf16.msra.mxu0 %v591
    %614 = vmatprep.subr.bf16.mxu0 0
    %615 = vmatpush1.bf16.msra.mxu0 %v590
    %616 = vmatprep.subr.bf16.mxu0 0
    %617 = vmatpush1.bf16.msra.mxu0 %v589
    %618 = vmatprep.subr.bf16.mxu0 0
    %619 = vmatpush1.bf16.msra.mxu0 %v588
    %620 = vmatprep.subr.bf16.mxu0 0
    %621 = vmatpush2.bf16.msra.mxu0 0
    %622 = vmatprep.subr.bf16.mxu0 0
    %623 = vmatpush2.bf16.msra.mxu0 0
    %624 = vmatprep.subr.bf16.mxu0 0
    %625 = vmatpush2.bf16.msra.mxu0 0
    %626 = vmatprep.subr.bf16.mxu0 0
    %627 = vmatpush2.bf16.msra.mxu0 0
    %628 = vmatprep.subr.bf16.mxu0 0
    %629 = vmatpush2.bf16.msra.mxu0 0
    %630 = vmatprep.subr.bf16.mxu0 0
    %631 = vmatpush2.bf16.msra.mxu0 0
    %632 = vmatprep.subr.bf16.mxu0 0
    %633 = vmatpush2.bf16.msra.mxu0 0
    %634 = vmatprep.subr.bf16.mxu0 0
    %635 = vmatpush2.bf16.msra.mxu0 0
    %636 = vmatprep.mubr.bf16.mxu0 0
    %637 = vmatmul.mubr.bf16.gmra.mxu0 %v532
    %v638 = vpop.f32.mrf.mxu0
    %v639 = vadd.f32 %v554, %v638
    %v640 = vpop.f32.mrf.mxu0
    %v641 = vpop.f32.mrf.mxu0
    %v642 = vpop.f32.mrf.mxu0
    %643 = vdwg.mxu0
    %v644 = vadd.f32 %v476, %v639
    %v645 = vxor.u32 %v644, 2147483648
    %v646 = vmul.f32 %v645, 1.442695
    %v647 = vpow.pop %v646
    %v648 = vadd.f32 %v647, 1.0
    %v649 = vrcp.pop %v648
    %v650 = vmul.f32 1.0, %v649
    %v651 = vtanh.pop %v531
    %v652 = vmul.f32 %v650, %v651
    %653 = vst [vmem:[#allocation8] sm:$0xff] %v652
    %654 = vst [vmem:[#allocation8 + $0x8] sm:$0xff] %v531
    // Predicated region
    $region50: #{tpu_custom_call.1} parent=1 // pred_check
      _
    $region51: #{tpu_custom_call.1} parent=1 // pred_check_branch
      %656 = sbr.rel (0) target = $region53
    $region52: #{tpu_custom_call.1} parent=1 // pred_region
      %s658 = ssub.s32 256, 256
      %659 = vsyncadd [#allocation4], %s658
      %s661 = sshll.u32 [#allocation8], 4
      %s662 = int_to_ptr.vmem [resolvable:$true] %s661
      %664 = dma.vmem_to_hbm [thread:$0]  %s662, 256, %s9, [#allocation4]
    $region53: #{tpu_custom_call.1} parent=1 // pred_fallthru
      _
    // Predicated region
    $region54: #{tpu_custom_call.1} parent=1 // pred_check
      _
    $region55: #{tpu_custom_call.1} parent=1 // pred_check_branch
      %666 = sbr.rel (0) target = $region57
    $region56: #{tpu_custom_call.1} parent=1 // pred_region
      %667 = dma.done [#allocation4], 256
    $region57: #{tpu_custom_call.1} parent=1 // pred_fallthru
      _
    %668 = vsyncpa [#allocation3], 1
    %669 = vsyncpa [#allocation6], 1
    %670 = vsyncpa [#allocation4], 1

</llo_original>
